<compile_context>
chip_gen: v6e
topology: v6e:2x2x1
jax: 0.10.0
libtpu: 0.0.40
codegen_flags: <defaults>
</compile_context>

<pallas_src>
import functools

import jax
import jax.numpy as jnp
from jax.experimental import pallas as pl
from jax.experimental.pallas import tpu as pltpu

HIDDEN = 128
HEAD_ROWS = 8  # actor col0, actor col1, critic value, + zero pad to a sublane tile


def _cdiv(a, b):
    return -(-a // b)


def _round_up(x, m):
    return _cdiv(x, m) * m


def _actor_critic_kernel(
    state_ref,         # [TB, IN]       f32 (cast to bf16 in-kernel)
    w1_ref, b1_ref,    # [IN, 128] bf16, [1, 128] f32
    w2_ref, b2_ref,    # [128, 128] bf16, [1, 128] f32
    wht_ref, bht_ref,  # [8, 128] bf16 (fused transposed head), [8, 1] f32
    out_ref,           # [8, TB] f32 (row0 = sigmoid, row1 = 30*tanh, row2 = value)
):
    x = state_ref[...].astype(jnp.bfloat16)

    # fc1 + relu (MXU bf16, f32 accumulate)
    h1 = jnp.dot(x, w1_ref[...], preferred_element_type=jnp.float32) + b1_ref[...]
    h1 = jnp.maximum(h1, 0.0).astype(jnp.bfloat16)

    # fc2 + relu
    h2 = jnp.dot(h1, w2_ref[...], preferred_element_type=jnp.float32) + b2_ref[...]
    h2 = jnp.maximum(h2, 0.0).astype(jnp.bfloat16)

    # Fused, transposed actor+critic head: head[r, b] = sum_k wht[r, k] * h2[b, k].
    # Batch ends up on the lane axis -> lane-dense (8, TB) output, tiny writeback.
    head = jax.lax.dot_general(
        wht_ref[...], h2, (((1,), (1,)), ((), ())),
        preferred_element_type=jnp.float32,
    ) + bht_ref[...]

    # Single shared-exp postprocess over only 8 sublanes:
    #   row 0: sigmoid(x)   = 1 / (1 + exp(-x))
    #   row 1: 30 * tanh(x) = 30 * (2 / (1 + exp(-2x)) - 1)
    #   row 2: identity (critic value); rows 3..7: zero padding pass-through
    row = jax.lax.broadcasted_iota(jnp.int32, head.shape, 0)
    arg = jnp.where(row == 0, -head, jnp.where(row == 1, -2.0 * head, 0.0))
    e = jnp.exp(arg)
    inv = pl.reciprocal(1.0 + e, approx=False)  # exact: keeps 2e-3 parity with reference
    out_ref[...] = jnp.where(
        row == 0, inv, jnp.where(row == 1, 30.0 * (2.0 * inv - 1.0), head))


def _choose_tiling(batch, tile_b):
    """Pick (tile, n_tiles, padded_batch).

    - tile is a multiple of 128 (it is the lane dim of the output block),
    - >=2 tiles once batch >= 256 so ("parallel",) engages both v7x TCs,
    - padding is bounded to <=~128 rows per tile (no 2x pad blowups)."""
    tile_b = max(128, _round_up(tile_b, 128))
    b128 = _round_up(max(batch, 1), 128)
    n_tiles = _cdiv(b128, tile_b)
    if b128 >= 2 * 128:
        n_tiles = max(n_tiles, 2)
    tb = _round_up(_cdiv(b128, n_tiles), 128)
    return tb, n_tiles, tb * n_tiles


@functools.partial(jax.jit, static_argnames=("tile_b",))
def actor_critic_forward(state, kparams, tile_b=1024):
    """state: [B, input_size] float32. kparams: packed params (see pack_params).

    Returns (action [B, 2], value [B, 1])."""
    B, in_size = state.shape
    w1, b1 = kparams["w1"], kparams["b1"]
    w2, b2 = kparams["w2"], kparams["b2"]
    wht, bht = kparams["wht"], kparams["bht"]

    tb, n_tiles, b_pad = _choose_tiling(B, tile_b)

    x = state  # f32 straight in; cast to bf16 inside the kernel
    if b_pad != B:
        x = jnp.pad(x, ((0, b_pad - B), (0, 0)))

    resident = lambda shape: pl.BlockSpec(shape, lambda i: (0, 0))  # stays in VMEM

    out = pl.pallas_call(
        _actor_critic_kernel,
        out_shape=jax.ShapeDtypeStruct((HEAD_ROWS, b_pad), jnp.float32),
        grid=(n_tiles,),
        in_specs=[
            pl.BlockSpec((tb, in_size), lambda i: (i, 0)),
            resident(w1.shape), resident(b1.shape),
            resident(w2.shape), resident(b2.shape),
            resident(wht.shape), resident(bht.shape),
        ],
        out_specs=pl.BlockSpec((HEAD_ROWS, tb), lambda i: (0, i)),
        compiler_params=pltpu.CompilerParams(
            dimension_semantics=("parallel",),  # shards batch tiles across TCs on v7x
        ),
    )(x, w1, b1, w2, b2, wht, bht)

    # Padded rows (>= B) carry bias-driven garbage; sliced off here.
    action = out[0:2, :B].T  # [B, 2]: col0 = sigmoid(mean0), col1 = 30*tanh(mean1)
    value = out[2:3, :B].T   # [B, 1]
    return action, value


def init_params(key, input_size, action_size, hidden=HIDDEN):
    """PyTorch-Linear-style init: U(-1/sqrt(fan_in), 1/sqrt(fan_in)).

    Weights stored as [in, out] so the forward is x @ W + b (== x @ W_torch.T + b)."""
    def linear(key, fan_in, fan_out):
        kw, kb = jax.random.split(key)
        bound = 1.0 / jnp.sqrt(fan_in)
        w = jax.random.uniform(kw, (fan_in, fan_out), jnp.float32, -bound, bound)
        b = jax.random.uniform(kb, (1, fan_out), jnp.float32, -bound, bound)
        return w, b

    k1, k2, k3, k4 = jax.random.split(key, 4)
    w1, b1 = linear(k1, input_size, hidden)
    w2, b2 = linear(k2, hidden, hidden)
    wa, ba = linear(k3, hidden, action_size)
    wc, bc = linear(k4, hidden, 1)
    return dict(w1=w1, b1=b1, w2=w2, b2=b2, wa=wa, ba=ba, wc=wc, bc=bc)


def pack_params(params):
    """Pack f32 reference params into the kernel layout: bf16 weights plus a
    fused, TRANSPOSED [8, 128] head weight / [8, 1] head bias (rows: actor
    col 0, actor col 1, critic, zero padding)."""
    a = params["wa"].shape[1]
    wht = jnp.concatenate([params["wa"].T, params["wc"].T], axis=0)   # [A+1, 128]
    wht = jnp.pad(wht, ((0, HEAD_ROWS - (a + 1)), (0, 0)))            # [8, 128]
    bht = jnp.concatenate([params["ba"].T, params["bc"].T], axis=0)   # [A+1, 1]
    bht = jnp.pad(bht, ((0, HEAD_ROWS - (a + 1)), (0, 0)))            # [8, 1]
    return dict(
        w1=params["w1"].astype(jnp.bfloat16), b1=params["b1"],
        w2=params["w2"].astype(jnp.bfloat16), b2=params["b2"],
        wht=wht.astype(jnp.bfloat16), bht=bht,
    )


def reference_forward(state, params):
    """Pure-JAX reference of the PyTorch forward, mirroring the kernel's bf16
    quantization points so it can be compared tightly."""
    q = lambda a: a.astype(jnp.bfloat16)
    h1 = jnp.maximum(
        jnp.dot(q(state), q(params["w1"]), preferred_element_type=jnp.float32)
        + params["b1"], 0.0)
    h2 = jnp.maximum(
        jnp.dot(q(h1), q(params["w2"]), preferred_element_type=jnp.float32)
        + params["b2"], 0.0)
    mean = jnp.dot(q(h2), q(params["wa"]), preferred_element_type=jnp.float32) + params["ba"]
    value = jnp.dot(q(h2), q(params["wc"]), preferred_element_type=jnp.float32) + params["bc"]
    lin = jax.nn.sigmoid(mean[:, 0:1])
    ang = jnp.tanh(mean[:, 1:2]) * 30.0
    return jnp.concatenate([lin, ang], axis=1), value


if __name__ == "__main__":
    INPUT_SIZE = 32
    ACTION_SIZE = 2
    BATCH = 8

    key = jax.random.PRNGKey(0)
    k_params, k_state = jax.random.split(key)

    params = init_params(k_params, INPUT_SIZE, ACTION_SIZE)
    kparams = pack_params(params)
    state = jax.random.normal(k_state, (BATCH, INPUT_SIZE), jnp.float32)

    action, value = jax.block_until_ready(actor_critic_forward(state, kparams))

    ref_action, ref_value = reference_forward(state, params)
    assert action.shape == (BATCH, 2) and value.shape == (BATCH, 1)
    assert jnp.allclose(action, ref_action, atol=2e-3, rtol=2e-3)
    assert jnp.allclose(value, ref_value, atol=2e-3, rtol=2e-3)

    print("KERNEL_OK")
</pallas_src>

<mosaic_0001>
module attributes {stable_mosaic.version = 11 : i64} {
  func.func @_actor_critic_kernel(%arg0: i32, %arg1: memref<128x32xf32, #tpu.memory_space<vmem>>, %arg2: memref<32x128xbf16, #tpu.memory_space<vmem>>, %arg3: memref<1x128xf32, #tpu.memory_space<vmem>>, %arg4: memref<128x128xbf16, #tpu.memory_space<vmem>>, %arg5: memref<1x128xf32, #tpu.memory_space<vmem>>, %arg6: memref<8x128xbf16, #tpu.memory_space<vmem>>, %arg7: memref<8x1xf32, #tpu.memory_space<vmem>>, %arg8: memref<8x128xf32, #tpu.memory_space<vmem>>) attributes {dimension_semantics = [#tpu.dimension_semantics<parallel>], iteration_bounds = array<i64: 1>, scalar_prefetch = 0 : i64, scratch_operands = 0 : i64, tpu.core_type = #tpu.core_type<tc>, window_params = [{transform_indices = @transform_0, window_bounds = array<i64: 128, 32>}, {pipeline_mode = #tpu.pipeline_mode<synchronous>, transform_indices = @transform_1, window_bounds = array<i64: 32, 128>}, {pipeline_mode = #tpu.pipeline_mode<synchronous>, transform_indices = @transform_2, window_bounds = array<i64: 1, 128>}, {pipeline_mode = #tpu.pipeline_mode<synchronous>, transform_indices = @transform_3, window_bounds = array<i64: 128, 128>}, {pipeline_mode = #tpu.pipeline_mode<synchronous>, transform_indices = @transform_4, window_bounds = array<i64: 1, 128>}, {pipeline_mode = #tpu.pipeline_mode<synchronous>, transform_indices = @transform_5, window_bounds = array<i64: 8, 128>}, {pipeline_mode = #tpu.pipeline_mode<synchronous>, transform_indices = @transform_6, window_bounds = array<i64: 8, 1>}, {transform_indices = @transform_7, window_bounds = array<i64: 8, 128>}]} {
    %c0 = arith.constant 0 : index
    %c0_0 = arith.constant 0 : index
    %0 = vector.load %arg1[%c0, %c0_0] : memref<128x32xf32, #tpu.memory_space<vmem>>, vector<128x32xf32>
    %1 = arith.truncf %0 : vector<128x32xf32> to vector<128x32xbf16>
    %c0_1 = arith.constant 0 : index
    %c0_2 = arith.constant 0 : index
    %2 = vector.load %arg2[%c0_1, %c0_2] : memref<32x128xbf16, #tpu.memory_space<vmem>>, vector<32x128xbf16>
    %cst = arith.constant dense<0.000000e+00> : vector<128x128xf32>
    %3 = tpu.matmul %1, %2, %cst {dimension_numbers = #tpu.dot_dimension_numbers<[1], [0], [0], [1], [0, 0, 1, 1], [], []>} : vector<128x32xbf16>, vector<32x128xbf16>, vector<128x128xf32> -> vector<128x128xf32>
    %c0_3 = arith.constant 0 : index
    %c0_4 = arith.constant 0 : index
    %4 = vector.load %arg3[%c0_3, %c0_4] : memref<1x128xf32, #tpu.memory_space<vmem>>, vector<1x128xf32>
    %5 = vector.broadcast %4 : vector<1x128xf32> to vector<128x128xf32>
    %6 = arith.addf %3, %5 : vector<128x128xf32>
    %cst_5 = arith.constant 0.000000e+00 : f32
    %7 = vector.broadcast %cst_5 : f32 to vector<128x128xf32>
    %8 = arith.maximumf %6, %7 : vector<128x128xf32>
    %9 = arith.truncf %8 : vector<128x128xf32> to vector<128x128xbf16>
    %c0_6 = arith.constant 0 : index
    %c0_7 = arith.constant 0 : index
    %10 = vector.load %arg4[%c0_6, %c0_7] : memref<128x128xbf16, #tpu.memory_space<vmem>>, vector<128x128xbf16>
    %cst_8 = arith.constant dense<0.000000e+00> : vector<128x128xf32>
    %11 = tpu.matmul %9, %10, %cst_8 {dimension_numbers = #tpu.dot_dimension_numbers<[1], [0], [0], [1], [0, 0, 1, 1], [], []>} : vector<128x128xbf16>, vector<128x128xbf16>, vector<128x128xf32> -> vector<128x128xf32>
    %c0_9 = arith.constant 0 : index
    %c0_10 = arith.constant 0 : index
    %12 = vector.load %arg5[%c0_9, %c0_10] : memref<1x128xf32, #tpu.memory_space<vmem>>, vector<1x128xf32>
    %13 = vector.broadcast %12 : vector<1x128xf32> to vector<128x128xf32>
    %14 = arith.addf %11, %13 : vector<128x128xf32>
    %cst_11 = arith.constant 0.000000e+00 : f32
    %15 = vector.broadcast %cst_11 : f32 to vector<128x128xf32>
    %16 = arith.maximumf %14, %15 : vector<128x128xf32>
    %17 = arith.truncf %16 : vector<128x128xf32> to vector<128x128xbf16>
    %c0_12 = arith.constant 0 : index
    %c0_13 = arith.constant 0 : index
    %18 = vector.load %arg6[%c0_12, %c0_13] : memref<8x128xbf16, #tpu.memory_space<vmem>>, vector<8x128xbf16>
    %cst_14 = arith.constant dense<0.000000e+00> : vector<8x128xf32>
    %19 = tpu.matmul %18, %17, %cst_14 {dimension_numbers = #tpu.dot_dimension_numbers<[1], [1], [0], [0], [0, 0, 1, 0], [], []>} : vector<8x128xbf16>, vector<128x128xbf16>, vector<8x128xf32> -> vector<8x128xf32>
    %c0_15 = arith.constant 0 : index
    %c0_16 = arith.constant 0 : index
    %20 = vector.load %arg7[%c0_15, %c0_16] : memref<8x1xf32, #tpu.memory_space<vmem>>, vector<8x1xf32>
    %21 = vector.broadcast %20 : vector<8x1xf32> to vector<8x128xf32>
    %22 = arith.addf %19, %21 : vector<8x128xf32>
    %23 = tpu.iota {dimensions = array<i32: 0>} : vector<8x128xi32>
    %c0_i32 = arith.constant 0 : i32
    %24 = vector.broadcast %c0_i32 : i32 to vector<8x128xi32>
    %25 = arith.cmpi eq, %23, %24 : vector<8x128xi32>
    %cst_17 = arith.constant 0.000000e+00 : f32
    %26 = vector.broadcast %cst_17 : f32 to vector<8x128xf32>
    %27 = arith.subf %26, %22 : vector<8x128xf32>
    %c1_i32 = arith.constant 1 : i32
    %28 = vector.broadcast %c1_i32 : i32 to vector<8x128xi32>
    %29 = arith.cmpi eq, %23, %28 : vector<8x128xi32>
    %cst_18 = arith.constant -2.000000e+00 : f32
    %30 = vector.broadcast %cst_18 : f32 to vector<8x128xf32>
    %31 = arith.mulf %30, %22 : vector<8x128xf32>
    %cst_19 = arith.constant 0.000000e+00 : f32
    %32 = vector.broadcast %cst_19 : f32 to vector<8x128xf32>
    %33 = arith.select %29, %31, %32 : vector<8x128xi1>, vector<8x128xf32>
    %34 = arith.select %25, %27, %33 : vector<8x128xi1>, vector<8x128xf32>
    %35 = math.exp %34 : vector<8x128xf32>
    %cst_20 = arith.constant 1.000000e+00 : f32
    %36 = vector.broadcast %cst_20 : f32 to vector<8x128xf32>
    %37 = arith.addf %36, %35 : vector<8x128xf32>
    %38 = tpu.reciprocal %37 : vector<8x128xf32> -> vector<8x128xf32>
    %c0_i32_21 = arith.constant 0 : i32
    %39 = vector.broadcast %c0_i32_21 : i32 to vector<8x128xi32>
    %40 = arith.cmpi eq, %23, %39 : vector<8x128xi32>
    %c1_i32_22 = arith.constant 1 : i32
    %41 = vector.broadcast %c1_i32_22 : i32 to vector<8x128xi32>
    %42 = arith.cmpi eq, %23, %41 : vector<8x128xi32>
    %cst_23 = arith.constant 2.000000e+00 : f32
    %43 = vector.broadcast %cst_23 : f32 to vector<8x128xf32>
    %44 = arith.mulf %43, %38 : vector<8x128xf32>
    %cst_24 = arith.constant 1.000000e+00 : f32
    %45 = vector.broadcast %cst_24 : f32 to vector<8x128xf32>
    %46 = arith.subf %44, %45 : vector<8x128xf32>
    %cst_25 = arith.constant 3.000000e+01 : f32
    %47 = vector.broadcast %cst_25 : f32 to vector<8x128xf32>
    %48 = arith.mulf %47, %46 : vector<8x128xf32>
    %49 = arith.select %42, %48, %22 : vector<8x128xi1>, vector<8x128xf32>
    %50 = arith.select %40, %38, %49 : vector<8x128xi1>, vector<8x128xf32>
    %c0_26 = arith.constant 0 : index
    %c0_27 = arith.constant 0 : index
    %51 = vector.load %arg8[%c0_26, %c0_27] : memref<8x128xf32, #tpu.memory_space<vmem>>, vector<8x128xf32>
    tpu.vector_store %arg8[%c0_26, %c0_27], %50 {strides = array<i32>} : memref<8x128xf32, #tpu.memory_space<vmem>>, vector<8x128xf32>,
    return
  }
  func.func @transform_0(%arg0: i32) -> (i32, i32) {
    %c0_i32 = arith.constant 0 : i32
    %c0_i32_0 = arith.constant 0 : i32
    return %arg0, %c0_i32 : i32, i32
  }
  func.func @transform_1(%arg0: i32) -> (i32, i32) {
    %c0_i32 = arith.constant 0 : i32
    %c0_i32_0 = arith.constant 0 : i32
    %c0_i32_1 = arith.constant 0 : i32
    return %c0_i32, %c0_i32_0 : i32, i32
  }
  func.func @transform_2(%arg0: i32) -> (i32, i32) {
    %c0_i32 = arith.constant 0 : i32
    %c0_i32_0 = arith.constant 0 : i32
    %c0_i32_1 = arith.constant 0 : i32
    return %c0_i32, %c0_i32_0 : i32, i32
  }
  func.func @transform_3(%arg0: i32) -> (i32, i32) {
    %c0_i32 = arith.constant 0 : i32
    %c0_i32_0 = arith.constant 0 : i32
    %c0_i32_1 = arith.constant 0 : i32
    return %c0_i32, %c0_i32_0 : i32, i32
  }
  func.func @transform_4(%arg0: i32) -> (i32, i32) {
    %c0_i32 = arith.constant 0 : i32
    %c0_i32_0 = arith.constant 0 : i32
    %c0_i32_1 = arith.constant 0 : i32
    return %c0_i32, %c0_i32_0 : i32, i32
  }
  func.func @transform_5(%arg0: i32) -> (i32, i32) {
    %c0_i32 = arith.constant 0 : i32
    %c0_i32_0 = arith.constant 0 : i32
    %c0_i32_1 = arith.constant 0 : i32
    return %c0_i32, %c0_i32_0 : i32, i32
  }
  func.func @transform_6(%arg0: i32) -> (i32, i32) {
    %c0_i32 = arith.constant 0 : i32
    %c0_i32_0 = arith.constant 0 : i32
    %c0_i32_1 = arith.constant 0 : i32
    return %c0_i32, %c0_i32_0 : i32, i32
  }
  func.func @transform_7(%arg0: i32) -> (i32, i32) {
    %c0_i32 = arith.constant 0 : i32
    %c0_i32_0 = arith.constant 0 : i32
    return %c0_i32, %arg0 : i32, i32
  }
}

</mosaic_0001>

<llo_original>
// kernel: actor_critic_forward.1
$region0: #{actor_critic_forward.1}
  #allocation0 [shape = 'u32[]', space=smem, size = 0x4, offset = 0x4, fixed_abs, tag = 'smem constant byte address 0x4 - core index']
  #allocation1 [shape = 'u32[144,128]{1,0:T(1,128)}', space=vmem, size = 0x12000, scoped, tag = 'internal scratch']
  %s0 = inlined_call_operand.vmem [shape: f32[128,32], index: 0, kind: input, shape index: {}]
  %s1 = inlined_call_operand.vmem [shape: bf16[32,128], index: 1, kind: input, shape index: {}]
  %s2 = inlined_call_operand.vmem [shape: f32[1,128], index: 2, kind: input, shape index: {}]
  %s3 = inlined_call_operand.vmem [shape: bf16[128,128], index: 3, kind: input, shape index: {}]
  %s4 = inlined_call_operand.vmem [shape: f32[1,128], index: 4, kind: input, shape index: {}]
  %s5 = inlined_call_operand.vmem [shape: bf16[8,128], index: 5, kind: input, shape index: {}]
  %s6 = inlined_call_operand.vmem [shape: f32[8,1], index: 6, kind: input, shape index: {}]
  %s7 = inlined_call_operand.vmem [shape: f32[8,128], index: 7, kind: output, shape index: {}]
  %s8 = sld [smem:[#allocation0]]
  $region38: #{actor_critic_forward.1} parent=0
    _
  %s10 = ssub.s32 1, %s8
  %s11 = scalar_select 0, %s10, %s8
  // Predicated region
  $region2: #{actor_critic_forward.1} parent=0 // pred_check
    _
  $region3: #{actor_critic_forward.1} parent=0 // pred_check_branch
    %13 = sbr.rel (0) target = $region5
  $region4: #{actor_critic_forward.1} parent=0 // pred_region
    _
  $region5: #{actor_critic_forward.1} parent=0 // pred_fallthru
    _
  // Predicated region
  $region6: #{actor_critic_forward.1} parent=0 // pred_check
    _
  $region7: #{actor_critic_forward.1} parent=0 // pred_check_branch
    %15 = sbr.rel (0) target = $region9
  $region8: #{actor_critic_forward.1} parent=0 // pred_region
    _
  $region9: #{actor_critic_forward.1} parent=0 // pred_fallthru
    _
  // Predicated region
  $region10: #{actor_critic_forward.1} parent=0 // pred_check
    _
  $region11: #{actor_critic_forward.1} parent=0 // pred_check_branch
    %17 = sbr.rel (0) target = $region13
  $region12: #{actor_critic_forward.1} parent=0 // pred_region
    _
  $region13: #{actor_critic_forward.1} parent=0 // pred_fallthru
    _
  // Predicated region
  $region14: #{actor_critic_forward.1} parent=0 // pred_check
    _
  $region15: #{actor_critic_forward.1} parent=0 // pred_check_branch
    %19 = sbr.rel (0) target = $region17
  $region16: #{actor_critic_forward.1} parent=0 // pred_region
    _
  $region17: #{actor_critic_forward.1} parent=0 // pred_fallthru
    _
  // Predicated region
  $region18: #{actor_critic_forward.1} parent=0 // pred_check
    _
  $region19: #{actor_critic_forward.1} parent=0 // pred_check_branch
    %21 = sbr.rel (0) target = $region21
  $region20: #{actor_critic_forward.1} parent=0 // pred_region
    _
  $region21: #{actor_critic_forward.1} parent=0 // pred_fallthru
    _
  // Predicated region
  $region22: #{actor_critic_forward.1} parent=0 // pred_check
    _
  $region23: #{actor_critic_forward.1} parent=0 // pred_check_branch
    %23 = sbr.rel (0) target = $region25
  $region24: #{actor_critic_forward.1} parent=0 // pred_region
    _
  $region25: #{actor_critic_forward.1} parent=0 // pred_fallthru
    _
  // Predicated region
  $region26: #{actor_critic_forward.1} parent=0 // pred_check
    _
  $region27: #{actor_critic_forward.1} parent=0 // pred_check_branch
    %25 = sbr.rel (0) target = $region29
  $region28: #{actor_critic_forward.1} parent=0 // pred_region
    _
  $region29: #{actor_critic_forward.1} parent=0 // pred_fallthru
    _
  %v27 = vld [vmem:[%s0] sm:$0xff]
  %v28 = vld [vmem:[%s0 + $0x8] sm:$0xff]
  %v29 = vld [vmem:[%s0 + $0x10] sm:$0xff]
  %v30 = vld [vmem:[%s0 + $0x18] sm:$0xff]
  %v31 = vld [vmem:[%s0 + $0x20] sm:$0xff]
  %v32 = vld [vmem:[%s0 + $0x28] sm:$0xff]
  %v33 = vld [vmem:[%s0 + $0x30] sm:$0xff]
  %v34 = vld [vmem:[%s0 + $0x38] sm:$0xff]
  %v35 = vld [vmem:[%s0 + $0x40] sm:$0xff]
  %v36 = vld [vmem:[%s0 + $0x48] sm:$0xff]
  %v37 = vld [vmem:[%s0 + $0x50] sm:$0xff]
  %v38 = vld [vmem:[%s0 + $0x58] sm:$0xff]
  %v39 = vld [vmem:[%s0 + $0x60] sm:$0xff]
  %v40 = vld [vmem:[%s0 + $0x68] sm:$0xff]
  %v41 = vld [vmem:[%s0 + $0x70] sm:$0xff]
  %v42 = vld [vmem:[%s0 + $0x78] sm:$0xff]
  %v43 = vpack.c.bf16 %v28, %v27
  %v44 = vpack.c.bf16 %v30, %v29
  %v45 = vpack.c.bf16 %v32, %v31
  %v46 = vpack.c.bf16 %v34, %v33
  %v47 = vpack.c.bf16 %v36, %v35
  %v48 = vpack.c.bf16 %v38, %v37
  %v49 = vpack.c.bf16 %v40, %v39
  %v50 = vpack.c.bf16 %v42, %v41
  %v51 = vld [vmem:[%s1] sm:$0xf]
  %v52 = vld [vmem:[%s1 + $0x4] sm:$0xf]
  %v53 = vld [vmem:[%s1 + $0x8] sm:$0xf]
  %v54 = vld [vmem:[%s1 + $0xc] sm:$0xf]
  %v55 = vld [vmem:[%s2] sm:$0x1]
  %v57 = vlaneseq
  %v58 = vshrl.u32 %v57, 7
  %v59 = vsub.s32 0, %v58
  %v60 = vrot.slane %v55, %v59
  %v66 = vunpack.c.l.b16 %v51
  %v67 = vunpack.c.l.b16 %v52
  %v68 = vunpack.c.l.b16 %v53
  %v69 = vunpack.c.l.b16 %v54
  %v70 = vpack.c.b16 %v67, %v66
  %v71 = vpack.c.b16 %v69, %v68
  %vm74 = vcmask 261120
  %v76 = vsel %vm74, %v43, 0
  %v79 = vsel %vm74, %v44, 0
  %v82 = vsel %vm74, %v45, 0
  %v85 = vsel %vm74, %v46, 0
  %v88 = vsel %vm74, %v47, 0
  %v91 = vsel %vm74, %v48, 0
  %v94 = vsel %vm74, %v49, 0
  %v97 = vsel %vm74, %v50, 0
  %99 = vmatprep.subr.bf16.mxu0 0
  %100 = vmatpush1.bf16.msra.mxu0 0
  %101 = vmatprep.subr.bf16.mxu0 0
  %102 = vmatpush1.bf16.msra.mxu0 0
  %103 = vmatprep.subr.bf16.mxu0 0
  %104 = vmatpush1.bf16.msra.mxu0 0
  %105 = vmatprep.subr.bf16.mxu0 0
  %106 = vmatpush1.bf16.msra.mxu0 0
  %107 = vmatprep.subr.bf16.mxu0 0
  %108 = vmatpush1.bf16.msra.mxu0 0
  %109 = vmatprep.subr.bf16.mxu0 0
  %110 = vmatpush1.bf16.msra.mxu0 0
  %111 = vmatprep.subr.bf16.mxu0 0
  %112 = vmatpush1.bf16.msra.mxu0 %v71
  %113 = vmatprep.subr.bf16.mxu0 0
  %114 = vmatpush1.bf16.msra.mxu0 %v70
  %115 = vmatprep.subr.bf16.mxu0 0
  %116 = vmatpush2.bf16.msra.mxu0 0
  %117 = vmatprep.subr.bf16.mxu0 0
  %118 = vmatpush2.bf16.msra.mxu0 0
  %119 = vmatprep.subr.bf16.mxu0 0
  %120 = vmatpush2.bf16.msra.mxu0 0
  %121 = vmatprep.subr.bf16.mxu0 0
  %122 = vmatpush2.bf16.msra.mxu0 0
  %123 = vmatprep.subr.bf16.mxu0 0
  %124 = vmatpush2.bf16.msra.mxu0 0
  %125 = vmatprep.subr.bf16.mxu0 0
  %126 = vmatpush2.bf16.msra.mxu0 0
  %127 = vmatprep.subr.bf16.mxu0 0
  %128 = vmatpush2.bf16.msra.mxu0 0
  %129 = vmatprep.subr.bf16.mxu0 0
  %130 = vmatpush2.bf16.msra.mxu0 0
  %131 = vmatprep.mubr.bf16.mxu0 0
  %132 = vmatmul.mubr.bf16.gmra.mxu0 %v76
  %v133 = vpop.f32.mrf.mxu0
  %v134 = vadd.f32 %v60, %v133
  %v135 = vpop.f32.mrf.mxu0
  %v136 = vpop.f32.mrf.mxu0
  %v137 = vadd.f32 %v60, %v136
  %v138 = vpop.f32.mrf.mxu0
  %139 = vmatprep.mubr.bf16.mxu0 0
  %140 = vmatmul.mubr.bf16.gmra.mxu0 %v79
  %v141 = vpop.f32.mrf.mxu0
  %v142 = vadd.f32 %v60, %v141
  %v143 = vpop.f32.mrf.mxu0
  %v144 = vpop.f32.mrf.mxu0
  %v145 = vadd.f32 %v60, %v144
  %v146 = vpop.f32.mrf.mxu0
  %147 = vmatprep.mubr.bf16.mxu0 0
  %148 = vmatmul.mubr.bf16.gmra.mxu0 %v82
  %v149 = vpop.f32.mrf.mxu0
  %v150 = vadd.f32 %v60, %v149
  %v151 = vpop.f32.mrf.mxu0
  %v152 = vpop.f32.mrf.mxu0
  %v153 = vadd.f32 %v60, %v152
  %v154 = vpop.f32.mrf.mxu0
  %155 = vmatprep.mubr.bf16.mxu0 0
  %156 = vmatmul.mubr.bf16.gmra.mxu0 %v85
  %v157 = vpop.f32.mrf.mxu0
  %v158 = vadd.f32 %v60, %v157
  %v159 = vpop.f32.mrf.mxu0
  %v160 = vpop.f32.mrf.mxu0
  %v161 = vadd.f32 %v60, %v160
  %v162 = vpop.f32.mrf.mxu0
  %163 = vmatprep.mubr.bf16.mxu0 0
  %164 = vmatmul.mubr.bf16.gmra.mxu0 %v88
  %v165 = vpop.f32.mrf.mxu0
  %v166 = vadd.f32 %v60, %v165
  %v167 = vpop.f32.mrf.mxu0
  %v168 = vpop.f32.mrf.mxu0
  %v169 = vadd.f32 %v60, %v168
  %v170 = vpop.f32.mrf.mxu0
  %171 = vmatprep.mubr.bf16.mxu0 0
  %172 = vmatmul.mubr.bf16.gmra.mxu0 %v91
  %v173 = vpop.f32.mrf.mxu0
  %v174 = vadd.f32 %v60, %v173
  %v175 = vpop.f32.mrf.mxu0
  %v176 = vpop.f32.mrf.mxu0
  %v177 = vadd.f32 %v60, %v176
  %v178 = vpop.f32.mrf.mxu0
  %179 = vmatprep.mubr.bf16.mxu0 0
  %180 = vmatmul.mubr.bf16.gmra.mxu0 %v94
  %v181 = vpop.f32.mrf.mxu0
  %v182 = vadd.f32 %v60, %v181
  %v183 = vpop.f32.mrf.mxu0
  %v184 = vpop.f32.mrf.mxu0
  %v185 = vadd.f32 %v60, %v184
  %v186 = vpop.f32.mrf.mxu0
  %187 = vmatprep.mubr.bf16.mxu0 0
  %188 = vmatmul.mubr.bf16.gmra.mxu0 %v97
  %v189 = vpop.f32.mrf.mxu0
  %v190 = vadd.f32 %v60, %v189
  %v191 = vpop.f32.mrf.mxu0
  %v192 = vpop.f32.mrf.mxu0
  %v193 = vadd.f32 %v60, %v192
  %v194 = vpop.f32.mrf.mxu0
  %195 = vdwg.mxu0
  %v196 = vmax.f32 %v134, 0.0
  %v197 = vmax.f32 %v137, 0.0
  %v198 = vmax.f32 %v142, 0.0
  %v199 = vmax.f32 %v145, 0.0
  %v200 = vmax.f32 %v150, 0.0
  %v201 = vmax.f32 %v153, 0.0
  %v202 = vmax.f32 %v158, 0.0
  %v203 = vmax.f32 %v161, 0.0
  %v204 = vmax.f32 %v166, 0.0
  %v205 = vmax.f32 %v169, 0.0
  %v206 = vmax.f32 %v174, 0.0
  %v207 = vmax.f32 %v177, 0.0
  %v208 = vmax.f32 %v182, 0.0
  %v209 = vmax.f32 %v185, 0.0
  %v210 = vmax.f32 %v190, 0.0
  %v211 = vmax.f32 %v193, 0.0
  %v212 = vpack.c.bf16 %v197, %v196
  %v213 = vpack.c.bf16 %v199, %v198
  %v214 = vpack.c.bf16 %v201, %v200
  %v215 = vpack.c.bf16 %v203, %v202
  %v216 = vpack.c.bf16 %v205, %v204
  %v217 = vpack.c.bf16 %v207, %v206
  %v218 = vpack.c.bf16 %v209, %v208
  %v219 = vpack.c.bf16 %v211, %v210
  %v220 = vld [vmem:[%s3] sm:$0xf]
  %v221 = vld [vmem:[%s3 + $0x4] sm:$0xf]
  %v222 = vld [vmem:[%s3 + $0x8] sm:$0xf]
  %v223 = vld [vmem:[%s3 + $0xc] sm:$0xf]
  %v224 = vld [vmem:[%s3 + $0x10] sm:$0xf]
  %v225 = vld [vmem:[%s3 + $0x14] sm:$0xf]
  %v226 = vld [vmem:[%s3 + $0x18] sm:$0xf]
  %v227 = vld [vmem:[%s3 + $0x1c] sm:$0xf]
  %v228 = vld [vmem:[%s3 + $0x20] sm:$0xf]
  %v229 = vld [vmem:[%s3 + $0x24] sm:$0xf]
  %v230 = vld [vmem:[%s3 + $0x28] sm:$0xf]
  %v231 = vld [vmem:[%s3 + $0x2c] sm:$0xf]
  %v232 = vld [vmem:[%s3 + $0x30] sm:$0xf]
  %v233 = vld [vmem:[%s3 + $0x34] sm:$0xf]
  %v234 = vld [vmem:[%s3 + $0x38] sm:$0xf]
  %v235 = vld [vmem:[%s3 + $0x3c] sm:$0xf]
  %v236 = vld [vmem:[%s4] sm:$0x1]
  %v238 = vlaneseq
  %v239 = vshrl.u32 %v238, 7
  %v240 = vsub.s32 0, %v239
  %v241 = vrot.slane %v236, %v240
  %v259 = vunpack.c.l.b16 %v220
  %v260 = vunpack.c.l.b16 %v221
  %v261 = vunpack.c.l.b16 %v222
  %v262 = vunpack.c.l.b16 %v223
  %v263 = vunpack.c.l.b16 %v224
  %v264 = vunpack.c.l.b16 %v225
  %v265 = vunpack.c.l.b16 %v226
  %v266 = vunpack.c.l.b16 %v227
  %v267 = vunpack.c.l.b16 %v228
  %v268 = vunpack.c.l.b16 %v229
  %v269 = vunpack.c.l.b16 %v230
  %v270 = vunpack.c.l.b16 %v231
  %v271 = vunpack.c.l.b16 %v232
  %v272 = vunpack.c.l.b16 %v233
  %v273 = vunpack.c.l.b16 %v234
  %v274 = vunpack.c.l.b16 %v235
  %v275 = vpack.c.b16 %v260, %v259
  %v276 = vpack.c.b16 %v262, %v261
  %v277 = vpack.c.b16 %v264, %v263
  %v278 = vpack.c.b16 %v266, %v265
  %v279 = vpack.c.b16 %v268, %v267
  %v280 = vpack.c.b16 %v270, %v269
  %v281 = vpack.c.b16 %v272, %v271
  %v282 = vpack.c.b16 %v274, %v273
  %291 = vmatprep.subr.bf16.mxu0 0
  %292 = vmatpush1.bf16.msra.mxu0 %v282
  %293 = vmatprep.subr.bf16.mxu0 0
  %294 = vmatpush1.bf16.msra.mxu0 %v281
  %295 = vmatprep.subr.bf16.mxu0 0
  %296 = vmatpush1.bf16.msra.mxu0 %v280
  %297 = vmatprep.subr.bf16.mxu0 0
  %298 = vmatpush1.bf16.msra.mxu0 %v279
  %299 = vmatprep.subr.bf16.mxu0 0
  %300 = vmatpush1.bf16.msra.mxu0 %v278
  %301 = vmatprep.subr.bf16.mxu0 0
  %302 = vmatpush1.bf16.msra.mxu0 %v277
  %303 = vmatprep.subr.bf16.mxu0 0
  %304 = vmatpush1.bf16.msra.mxu0 %v276
  %305 = vmatprep.subr.bf16.mxu0 0
  %306 = vmatpush1.bf16.msra.mxu0 %v275
  %307 = vmatprep.subr.bf16.mxu0 0
  %308 = vmatpush2.bf16.msra.mxu0 0
  %309 = vmatprep.subr.bf16.mxu0 0
  %310 = vmatpush2.bf16.msra.mxu0 0
  %311 = vmatprep.subr.bf16.mxu0 0
  %312 = vmatpush2.bf16.msra.mxu0 0
  %313 = vmatprep.subr.bf16.mxu0 0
  %314 = vmatpush2.bf16.msra.mxu0 0
  %315 = vmatprep.subr.bf16.mxu0 0
  %316 = vmatpush2.bf16.msra.mxu0 0
  %317 = vmatprep.subr.bf16.mxu0 0
  %318 = vmatpush2.bf16.msra.mxu0 0
  %319 = vmatprep.subr.bf16.mxu0 0
  %320 = vmatpush2.bf16.msra.mxu0 0
  %321 = vmatprep.subr.bf16.mxu0 0
  %322 = vmatpush2.bf16.msra.mxu0 0
  %323 = vmatprep.mubr.bf16.mxu0 0
  %324 = vmatmul.mubr.bf16.gmra.mxu0 %v212
  %v325 = vpop.f32.mrf.mxu0
  %v326 = vadd.f32 %v241, %v325
  %v327 = vpop.f32.mrf.mxu0
  %v328 = vpop.f32.mrf.mxu0
  %v329 = vadd.f32 %v241, %v328
  %v330 = vpop.f32.mrf.mxu0
  %331 = vmatprep.mubr.bf16.mxu0 0
  %332 = vmatmul.mubr.bf16.gmra.mxu0 %v213
  %v333 = vpop.f32.mrf.mxu0
  %v334 = vadd.f32 %v241, %v333
  %v335 = vpop.f32.mrf.mxu0
  %v336 = vpop.f32.mrf.mxu0
  %v337 = vadd.f32 %v241, %v336
  %v338 = vpop.f32.mrf.mxu0
  %339 = vmatprep.mubr.bf16.mxu0 0
  %340 = vmatmul.mubr.bf16.gmra.mxu0 %v214
  %v341 = vpop.f32.mrf.mxu0
  %v342 = vadd.f32 %v241, %v341
  %v343 = vpop.f32.mrf.mxu0
  %v344 = vpop.f32.mrf.mxu0
  %v345 = vadd.f32 %v241, %v344
  %v346 = vpop.f32.mrf.mxu0
  %347 = vmatprep.mubr.bf16.mxu0 0
  %348 = vmatmul.mubr.bf16.gmra.mxu0 %v215
  %v349 = vpop.f32.mrf.mxu0
  %v350 = vadd.f32 %v241, %v349
  %v351 = vpop.f32.mrf.mxu0
  %v352 = vpop.f32.mrf.mxu0
  %v353 = vadd.f32 %v241, %v352
  %v354 = vpop.f32.mrf.mxu0
  %355 = vmatprep.mubr.bf16.mxu0 0
  %356 = vmatmul.mubr.bf16.gmra.mxu0 %v216
  %v357 = vpop.f32.mrf.mxu0
  %v358 = vadd.f32 %v241, %v357
  %v359 = vpop.f32.mrf.mxu0
  %v360 = vpop.f32.mrf.mxu0
  %v361 = vadd.f32 %v241, %v360
  %v362 = vpop.f32.mrf.mxu0
  %363 = vmatprep.mubr.bf16.mxu0 0
  %364 = vmatmul.mubr.bf16.gmra.mxu0 %v217
  %v365 = vpop.f32.mrf.mxu0
  %v366 = vadd.f32 %v241, %v365
  %v367 = vpop.f32.mrf.mxu0
  %v368 = vpop.f32.mrf.mxu0
  %v369 = vadd.f32 %v241, %v368
  %v370 = vpop.f32.mrf.mxu0
  %371 = vmatprep.mubr.bf16.mxu0 0
  %372 = vmatmul.mubr.bf16.gmra.mxu0 %v218
  %v373 = vpop.f32.mrf.mxu0
  %v374 = vadd.f32 %v241, %v373
  %v375 = vpop.f32.mrf.mxu0
  %v376 = vpop.f32.mrf.mxu0
  %v377 = vadd.f32 %v241, %v376
  %v378 = vpop.f32.mrf.mxu0
  %379 = vmatprep.mubr.bf16.mxu0 0
  %380 = vmatmul.mubr.bf16.gmra.mxu0 %v219
  %v381 = vpop.f32.mrf.mxu0
  %v382 = vadd.f32 %v241, %v381
  %v383 = vpop.f32.mrf.mxu0
  %v384 = vpop.f32.mrf.mxu0
  %v385 = vadd.f32 %v241, %v384
  %v386 = vpop.f32.mrf.mxu0
  %387 = vdwg.mxu0
  %v388 = vmax.f32 %v326, 0.0
  %v389 = vmax.f32 %v329, 0.0
  %v390 = vmax.f32 %v334, 0.0
  %v391 = vmax.f32 %v337, 0.0
  %v392 = vmax.f32 %v342, 0.0
  %v393 = vmax.f32 %v345, 0.0
  %v394 = vmax.f32 %v350, 0.0
  %v395 = vmax.f32 %v353, 0.0
  %v396 = vmax.f32 %v358, 0.0
  %v397 = vmax.f32 %v361, 0.0
  %v398 = vmax.f32 %v366, 0.0
  %v399 = vmax.f32 %v369, 0.0
  %v400 = vmax.f32 %v374, 0.0
  %v401 = vmax.f32 %v377, 0.0
  %v402 = vmax.f32 %v382, 0.0
  %v403 = vmax.f32 %v385, 0.0
  %v404 = vpack.c.bf16 %v389, %v388
  %v405 = vpack.c.bf16 %v391, %v390
  %v406 = vpack.c.bf16 %v393, %v392
  %v407 = vpack.c.bf16 %v395, %v394
  %v408 = vpack.c.bf16 %v397, %v396
  %v409 = vpack.c.bf16 %v399, %v398
  %v410 = vpack.c.bf16 %v401, %v400
  %v411 = vpack.c.bf16 %v403, %v402
  %v412 = vld [vmem:[%s5] sm:$0xf]
  %v413 = vld [vmem:[%s6] sm:$0xff]
  %415 = vset.pattern.permute.xlu0 0
  %416 = vperm.xlu0 %415, %v413
  %v417 = vpop.permute.xlu0 %416
  %419 = vmatprep.subr.bf16.mxu0 0
  %420 = vmatpush1.bf16.xpose.msra.mxu0 %v411
  %421 = vmatprep.subr.bf16.mxu0 0
  %422 = vmatpush1.bf16.xpose.msra.mxu0 %v410
  %423 = vmatprep.subr.bf16.mxu0 0
  %424 = vmatpush1.bf16.xpose.msra.mxu0 %v409
  %425 = vmatprep.subr.bf16.mxu0 0
  %426 = vmatpush1.bf16.xpose.msra.mxu0 %v408
  %427 = vmatprep.subr.bf16.mxu0 0
  %428 = vmatpush1.bf16.xpose.msra.mxu0 %v407
  %429 = vmatprep.subr.bf16.mxu0 0
  %430 = vmatpush1.bf16.xpose.msra.mxu0 %v406
  %431 = vmatprep.subr.bf16.mxu0 0
  %432 = vmatpush1.bf16.xpose.msra.mxu0 %v405
  %433 = vmatprep.subr.bf16.mxu0 0
  %434 = vmatpush1.bf16.xpose.msra.mxu0 %v404
  %435 = vmatprep.subr.bf16.mxu0 0
  %436 = vmatpush2.bf16.xpose.msra.mxu0 0
  %437 = vmatprep.subr.bf16.mxu0 0
  %438 = vmatpush2.bf16.xpose.msra.mxu0 0
  %439 = vmatprep.subr.bf16.mxu0 0
  %440 = vmatpush2.bf16.xpose.msra.mxu0 0
  %441 = vmatprep.subr.bf16.mxu0 0
  %442 = vmatpush2.bf16.xpose.msra.mxu0 0
  %443 = vmatprep.subr.bf16.mxu0 0
  %444 = vmatpush2.bf16.xpose.msra.mxu0 0
  %445 = vmatprep.subr.bf16.mxu0 0
  %446 = vmatpush2.bf16.xpose.msra.mxu0 0
  %447 = vmatprep.subr.bf16.mxu0 0
  %448 = vmatpush2.bf16.xpose.msra.mxu0 0
  %449 = vmatprep.subr.bf16.mxu0 0
  %450 = vmatpush2.bf16.xpose.msra.mxu0 0
  %451 = vmatprep.mubr.bf16.mxu0 0
  %452 = vmatmul.mubr.bf16.gmra.mxu0 %v412
  %v453 = vpop.f32.mrf.mxu0
  %v454 = vadd.f32 %v417, %v453
  %v455 = vpop.f32.mrf.mxu0
  %v456 = vpop.f32.mrf.mxu0
  %v457 = vpop.f32.mrf.mxu0
  %458 = vdwg.mxu0
  %v459 = vlaneseq
  %v460 = vshrl.u32 %v459, 7
  %vm461 = vcmp.eq.s32.totalorder %v460, 0
  %v462 = vsub.f32 0.0, %v454
  %vm463 = vcmp.eq.s32.totalorder %v460, 1
  %v464 = vmul.f32 %v454, -2.0
  %v465 = vsel %vm463, %v464, 0.0
  %v466 = vsel %vm461, %v462, %v465
  %v467 = vmul.f32 %v466, 1.442695
  %v468 = vpow.pop %v467
  %v469 = vadd.f32 %v468, 1.0
  %v470 = vrcp.pop %v469
  %v471 = vmul.f32 %v470, 2.0
  %v472 = vsub.f32 %v471, 1.0
  %v473 = vmul.f32 %v472, 30.0
  %v474 = vsel %vm463, %v473, %v454
  %v475 = vsel %vm461, %v470, %v474
  %476 = vst [vmem:[%s7] sm:$0xff] %v475
  // Predicated region
  $region30: #{actor_critic_forward.1} parent=0 // pred_check
    _
  $region31: #{actor_critic_forward.1} parent=0 // pred_check_branch
    %478 = sbr.rel (0) target = $region33
  $region32: #{actor_critic_forward.1} parent=0 // pred_region
    _
  $region33: #{actor_critic_forward.1} parent=0 // pred_fallthru
    _
  // Predicated region
  $region34: #{actor_critic_forward.1} parent=0 // pred_check
    _
  $region35: #{actor_critic_forward.1} parent=0 // pred_check_branch
    %480 = sbr.rel (0) target = $region37
  $region36: #{actor_critic_forward.1} parent=0 // pred_region
    _
  $region37: #{actor_critic_forward.1} parent=0 // pred_fallthru
    _

</llo_original>
